<compile_context>
chip_gen: v6e
topology: v6e:2x2x1
jax: 0.10.0
libtpu: 0.0.40
codegen_flags: <defaults>
</compile_context>

<pallas_src>
import functools

import jax
import jax.numpy as jnp
from jax import lax
from jax.experimental import pallas as pl
from jax.experimental.pallas import tpu as pltpu


def _encoder_kernel(x_ref, w1t_ref, b1_ref, w2t_ref, b2_ref, a1t_ref, wa_ref,
                    x_out_ref, logits_ref):
    """Fused: fc1 -> relu -> fc2 -> logits = x - sinh(3A)^T @ (x + Wa)."""
    tb, d, n_x = x_ref.shape
    n_out = x_out_ref.shape[-1]
    mm_dtype = w1t_ref.dtype                     # bf16 (prod) or f32 (checking)

    # ---- fc1 -> relu -> fc2, batch folded into the MXU M dimension ---------
    x2d = x_ref[...].reshape(tb * d, n_x)
    h1 = jnp.dot(x2d.astype(mm_dtype), w1t_ref[...],
                 preferred_element_type=jnp.float32) + b1_ref[...]
    h1 = jnp.maximum(h1, 0.0)                                   # f32, (tb*d, n_hid)
    xo = jnp.dot(h1.astype(mm_dtype), w2t_ref[...],
                 preferred_element_type=jnp.float32) + b2_ref[...]  # (tb*d, n_out)

    xo3 = xo.reshape(tb, d, n_out)
    x_out_ref[...] = xo3.astype(x_out_ref.dtype)

    # ---- logits = x - A1^T @ (x + Wa)  (identity eliminated algebraically) --
    y = (xo3 + wa_ref[...]).astype(mm_dtype)                    # (tb, d, n_out)
    corr = jnp.einsum('ij,bjo->bio', a1t_ref[...], y,
                      preferred_element_type=jnp.float32)
    logits_ref[...] = (xo3 - corr).astype(logits_ref.dtype)


def prepare_encoder_params(params, matmul_dtype=jnp.bfloat16):
    """One-time layout/dtype prep (pre-transposed weights). Reuse across calls."""
    return {
        "w1t": jnp.asarray(params["fc1_w"], jnp.float32).T.astype(matmul_dtype),
        "b1": jnp.asarray(params["fc1_b"], jnp.float32).reshape(1, -1),
        "w2t": jnp.asarray(params["fc2_w"], jnp.float32).T.astype(matmul_dtype),
        "b2": jnp.asarray(params["fc2_b"], jnp.float32).reshape(1, -1),
        "wa": jnp.asarray(params["Wa"], jnp.float32).reshape(1, 1, -1),
    }


def mlp_encoder_forward(inputs, params, prepared=None,
                        matmul_dtype=jnp.bfloat16, tile_rows=512):
    """Runs the Pallas kernel; returns the same 8-tuple as MLPEncoder.forward."""
    B, d, n_x = inputs.shape
    if prepared is None:
        prepared = prepare_encoder_params(params, matmul_dtype)
    mm_dtype = prepared["w1t"].dtype
    n_hid = prepared["w1t"].shape[1]
    n_out = prepared["w2t"].shape[1]

    adj_A = jnp.asarray(params["adj_A"], jnp.float32)
    adj_A1 = jnp.sinh(3.0 * adj_A)               # batch-invariant: plain XLA, once

    # ---- tile-friendly zero padding (exact; sliced off below) --------------
    d_pad = ((d + 7) // 8) * 8                   # node axis -> multiple of 8
    tile_b = max(1, min(B, tile_rows // d_pad)) if d_pad <= tile_rows else 1
    b_pad = ((B + tile_b - 1) // tile_b) * tile_b
    x_p = jnp.pad(inputs.astype(jnp.float32),
                  ((0, b_pad - B), (0, d_pad - d), (0, 0)))
    a1t_p = jnp.pad(adj_A1.T,
                    ((0, d_pad - d), (0, d_pad - d))).astype(mm_dtype)

    grid = (b_pad // tile_b,)

    # ---- VMEM budget: resident weights + double-buffered IO tiles + live ----
    mm_bytes = jnp.dtype(mm_dtype).itemsize
    rows = tile_b * d_pad
    resident = ((n_x * n_hid + n_hid * n_out + d_pad * d_pad) * mm_bytes
                + (n_hid + 2 * n_out) * 4)
    io_tile = rows * (n_x + 2 * n_out) * 4
    live = rows * (n_hid + 3 * n_out) * 4
    vmem_limit = int(min(64 * 2 ** 20,
                         max(32 * 2 ** 20, 2 * (resident + 2 * io_tile + live))))

    x_out_p, logits_p = pl.pallas_call(
        _encoder_kernel,
        out_shape=(
            jax.ShapeDtypeStruct((b_pad, d_pad, n_out), jnp.float32),
            jax.ShapeDtypeStruct((b_pad, d_pad, n_out), jnp.float32),
        ),
        grid=grid,
        in_specs=[
            pl.BlockSpec((tile_b, d_pad, n_x), lambda i: (i, 0, 0)),   # x (tiled)
            pl.BlockSpec((n_x, n_hid), lambda i: (0, 0)),              # w1^T resident
            pl.BlockSpec((1, n_hid), lambda i: (0, 0)),                # b1 resident
            pl.BlockSpec((n_hid, n_out), lambda i: (0, 0)),            # w2^T resident
            pl.BlockSpec((1, n_out), lambda i: (0, 0)),                # b2 resident
            pl.BlockSpec((d_pad, d_pad), lambda i: (0, 0)),            # sinh(3A)^T
            pl.BlockSpec((1, 1, n_out), lambda i: (0, 0, 0)),          # Wa resident
        ],
        out_specs=(
            pl.BlockSpec((tile_b, d_pad, n_out), lambda i: (i, 0, 0)),
            pl.BlockSpec((tile_b, d_pad, n_out), lambda i: (i, 0, 0)),
        ),
        compiler_params=pltpu.CompilerParams(
            dimension_semantics=("parallel",),
            vmem_limit_bytes=vmem_limit),
    )(x_p, prepared["w1t"], prepared["b1"], prepared["w2t"], prepared["b2"],
      a1t_p, prepared["wa"])

    x_out = x_out_p[:B, :d, :]
    logits = logits_p[:B, :d, :]
    adj_eye = jnp.eye(d, dtype=jnp.float32)
    return (x_out, logits, adj_A1, adj_eye,
            params["z"], params["z_positive"], adj_A, params["Wa"])


def init_params(key, d, n_xdims, n_hid, n_out, tol=0.1):
    """Deterministic parameter init mirroring MLPEncoder.__init__."""
    k1, k2, k3, k4 = jax.random.split(key, 4)
    # xavier_normal_: std = sqrt(2 / (fan_in + fan_out))
    w1 = jax.random.normal(k1, (n_hid, n_xdims), jnp.float32) * jnp.sqrt(
        2.0 / (n_xdims + n_hid))
    w2 = jax.random.normal(k2, (n_out, n_hid), jnp.float32) * jnp.sqrt(
        2.0 / (n_hid + n_out))
    # nn.Linear default bias init: U(-1/sqrt(fan_in), 1/sqrt(fan_in))
    b1 = jax.random.uniform(k3, (n_hid,), jnp.float32,
                            -1.0 / jnp.sqrt(n_xdims), 1.0 / jnp.sqrt(n_xdims))
    b2 = jax.random.uniform(k4, (n_out,), jnp.float32,
                            -1.0 / jnp.sqrt(n_hid), 1.0 / jnp.sqrt(n_hid))
    return {
        "fc1_w": w1, "fc1_b": b1,
        "fc2_w": w2, "fc2_b": b2,
        # adj_A is typically initialized near zero in DAG-GNN
        "adj_A": 0.01 * jax.random.normal(jax.random.fold_in(key, 7),
                                          (d, d), jnp.float32),
        "Wa": jnp.zeros((n_out,), jnp.float32),
        "z": jnp.asarray(tol, jnp.float32),
        "z_positive": jnp.ones((d, d), jnp.float32),
    }


def _reference_forward(inputs, params):
    """Plain-JAX reference (HIGHEST precision) for correctness check."""
    hp = lax.Precision.HIGHEST
    h1 = jax.nn.relu(jnp.einsum("bdi,hi->bdh", inputs, params["fc1_w"],
                                precision=hp) + params["fc1_b"])
    x = jnp.einsum("bdh,oh->bdo", h1, params["fc2_w"],
                   precision=hp) + params["fc2_b"]
    adj_a1 = jnp.sinh(3.0 * params["adj_A"])
    adj_forz = jnp.eye(adj_a1.shape[0], dtype=jnp.float32) - adj_a1.T
    logits = jnp.einsum("ij,bjo->bio", adj_forz, x + params["Wa"],
                        precision=hp) - params["Wa"]
    return x, logits, adj_a1


if __name__ == "__main__":
    # small shapes: batch=5, n_nodes(d)=7, n_xdims=4, n_hid=32, n_out=4
    # (d=7 / B=5 deliberately ragged to exercise the node/batch padding path;
    #  tile_rows=16 forces TILE_B=2 -> a 3-step grid)
    B, d, n_xdims, n_hid, n_out = 5, 7, 4, 32, 4
    key = jax.random.PRNGKey(0)
    kx, kp, kw = jax.random.split(key, 3)

    inputs = jax.random.normal(kx, (B, d, n_xdims), jnp.float32)
    params = init_params(kp, d, n_xdims, n_hid, n_out)
    # nonzero Wa so the (x + Wa) / -Wa algebra is actually exercised
    params["Wa"] = 0.1 * jax.random.normal(kw, (n_out,), jnp.float32)

    x_ref, logits_ref, adjA1_ref = _reference_forward(inputs, params)

    # ---- f32 matmul path: structural-exactness check ------------------------
    prepared_f32 = prepare_encoder_params(params, jnp.float32)
    fwd_f32 = jax.jit(functools.partial(mlp_encoder_forward,
                                        matmul_dtype=jnp.float32,
                                        tile_rows=16))
    outs = jax.block_until_ready(fwd_f32(inputs, params, prepared_f32))
    x_out, logits, adj_A1 = outs[0], outs[1], outs[2]
    assert x_out.shape == (B, d, n_out) and logits.shape == (B, d, n_out)
    assert jnp.allclose(x_out, x_ref, atol=1e-4, rtol=1e-4)
    assert jnp.allclose(logits, logits_ref, atol=1e-4, rtol=1e-4)
    assert jnp.allclose(adj_A1, adjA1_ref, atol=1e-6, rtol=1e-6)
    assert jnp.allclose(outs[3], jnp.eye(d, dtype=jnp.float32))

    # ---- bf16 matmul path (production default): loose check -----------------
    prepared_bf16 = prepare_encoder_params(params, jnp.bfloat16)
    fwd_bf16 = jax.jit(functools.partial(mlp_encoder_forward,
                                         matmul_dtype=jnp.bfloat16,
                                         tile_rows=16))
    outs_bf = jax.block_until_ready(fwd_bf16(inputs, params, prepared_bf16))
    assert jnp.allclose(outs_bf[0], x_ref, atol=5e-2, rtol=5e-2)
    assert jnp.allclose(outs_bf[1], logits_ref, atol=5e-2, rtol=5e-2)

    print("KERNEL_OK")
</pallas_src>

<mosaic_0001>
module attributes {stable_mosaic.version = 11 : i64} {
  func.func @_encoder_kernel(%arg0: i32, %arg1: memref<2x8x4xf32, #tpu.memory_space<vmem>>, %arg2: memref<4x32xf32, #tpu.memory_space<vmem>>, %arg3: memref<1x32xf32, #tpu.memory_space<vmem>>, %arg4: memref<32x4xf32, #tpu.memory_space<vmem>>, %arg5: memref<1x4xf32, #tpu.memory_space<vmem>>, %arg6: memref<8x8xf32, #tpu.memory_space<vmem>>, %arg7: memref<1x1x4xf32, #tpu.memory_space<vmem>>, %arg8: memref<2x8x4xf32, #tpu.memory_space<vmem>>, %arg9: memref<2x8x4xf32, #tpu.memory_space<vmem>>) attributes {dimension_semantics = [#tpu.dimension_semantics<parallel>], iteration_bounds = array<i64: 3>, scalar_prefetch = 0 : i64, scratch_operands = 0 : i64, tpu.core_type = #tpu.core_type<tc>, window_params = [{transform_indices = @transform_0, window_bounds = array<i64: 2, 8, 4>}, {pipeline_mode = #tpu.pipeline_mode<synchronous>, transform_indices = @transform_1, window_bounds = array<i64: 4, 32>}, {pipeline_mode = #tpu.pipeline_mode<synchronous>, transform_indices = @transform_2, window_bounds = array<i64: 1, 32>}, {pipeline_mode = #tpu.pipeline_mode<synchronous>, transform_indices = @transform_3, window_bounds = array<i64: 32, 4>}, {pipeline_mode = #tpu.pipeline_mode<synchronous>, transform_indices = @transform_4, window_bounds = array<i64: 1, 4>}, {pipeline_mode = #tpu.pipeline_mode<synchronous>, transform_indices = @transform_5, window_bounds = array<i64: 8, 8>}, {pipeline_mode = #tpu.pipeline_mode<synchronous>, transform_indices = @transform_6, window_bounds = array<i64: 1, 1, 4>}, {transform_indices = @transform_7, window_bounds = array<i64: 2, 8, 4>}, {transform_indices = @transform_8, window_bounds = array<i64: 2, 8, 4>}]} {
    %c0 = arith.constant 0 : index
    %c0_0 = arith.constant 0 : index
    %c0_1 = arith.constant 0 : index
    %0 = vector.load %arg1[%c0, %c0_0, %c0_1] : memref<2x8x4xf32, #tpu.memory_space<vmem>>, vector<2x8x4xf32>
    %1 = vector.shape_cast %0 : vector<2x8x4xf32> to vector<16x4xf32>
    %c0_2 = arith.constant 0 : index
    %c0_3 = arith.constant 0 : index
    %2 = vector.load %arg2[%c0_2, %c0_3] : memref<4x32xf32, #tpu.memory_space<vmem>>, vector<4x32xf32>
    %cst = arith.constant dense<0.000000e+00> : vector<16x32xf32>
    %3 = tpu.matmul %1, %2, %cst {dimension_numbers = #tpu.dot_dimension_numbers<[1], [0], [0], [1], [0, 0, 1, 1], [], []>} : vector<16x4xf32>, vector<4x32xf32>, vector<16x32xf32> -> vector<16x32xf32>
    %c0_4 = arith.constant 0 : index
    %c0_5 = arith.constant 0 : index
    %4 = vector.load %arg3[%c0_4, %c0_5] : memref<1x32xf32, #tpu.memory_space<vmem>>, vector<1x32xf32>
    %5 = vector.broadcast %4 : vector<1x32xf32> to vector<16x32xf32>
    %6 = arith.addf %3, %5 : vector<16x32xf32>
    %cst_6 = arith.constant 0.000000e+00 : f32
    %7 = vector.broadcast %cst_6 : f32 to vector<16x32xf32>
    %8 = arith.maximumf %6, %7 : vector<16x32xf32>
    %c0_7 = arith.constant 0 : index
    %c0_8 = arith.constant 0 : index
    %9 = vector.load %arg4[%c0_7, %c0_8] : memref<32x4xf32, #tpu.memory_space<vmem>>, vector<32x4xf32>
    %cst_9 = arith.constant dense<0.000000e+00> : vector<16x4xf32>
    %10 = tpu.matmul %8, %9, %cst_9 {dimension_numbers = #tpu.dot_dimension_numbers<[1], [0], [0], [1], [0, 0, 1, 1], [], []>} : vector<16x32xf32>, vector<32x4xf32>, vector<16x4xf32> -> vector<16x4xf32>
    %c0_10 = arith.constant 0 : index
    %c0_11 = arith.constant 0 : index
    %11 = vector.load %arg5[%c0_10, %c0_11] : memref<1x4xf32, #tpu.memory_space<vmem>>, vector<1x4xf32>
    %12 = vector.broadcast %11 : vector<1x4xf32> to vector<16x4xf32>
    %13 = arith.addf %10, %12 : vector<16x4xf32>
    %14 = vector.shape_cast %13 : vector<16x4xf32> to vector<2x8x4xf32>
    %c0_12 = arith.constant 0 : index
    %c0_13 = arith.constant 0 : index
    %c0_14 = arith.constant 0 : index
    %15 = vector.load %arg8[%c0_12, %c0_13, %c0_14] : memref<2x8x4xf32, #tpu.memory_space<vmem>>, vector<2x8x4xf32>
    tpu.vector_store %arg8[%c0_12, %c0_13, %c0_14], %14 {strides = array<i32>} : memref<2x8x4xf32, #tpu.memory_space<vmem>>, vector<2x8x4xf32>,
    %c0_15 = arith.constant 0 : index
    %c0_16 = arith.constant 0 : index
    %c0_17 = arith.constant 0 : index
    %16 = vector.load %arg7[%c0_15, %c0_16, %c0_17] : memref<1x1x4xf32, #tpu.memory_space<vmem>>, vector<1x1x4xf32>
    %17 = vector.broadcast %16 : vector<1x1x4xf32> to vector<2x8x4xf32>
    %18 = arith.addf %14, %17 : vector<2x8x4xf32>
    %c0_18 = arith.constant 0 : index
    %c0_19 = arith.constant 0 : index
    %19 = vector.load %arg6[%c0_18, %c0_19] : memref<8x8xf32, #tpu.memory_space<vmem>>, vector<8x8xf32>
    "tpu.trace_start"() <{level = 10 : i32, message = "ij,bjo->bio"}> : () -> ()
    %cst_20 = arith.constant dense<0.000000e+00> : vector<2x4x8xf32>
    %20 = tpu.matmul %18, %19, %cst_20 {dimension_numbers = #tpu.dot_dimension_numbers<[1], [1], [0, 2], [0], [0, 0, 0, 2, 1, 0], [], []>} : vector<2x8x4xf32>, vector<8x8xf32>, vector<2x4x8xf32> -> vector<2x4x8xf32>
    %21 = tpu.transpose %20, [0, 2, 1] : vector<2x4x8xf32> -> vector<2x8x4xf32>
    "tpu.trace_stop"() : () -> ()
    %22 = arith.subf %14, %21 : vector<2x8x4xf32>
    %c0_21 = arith.constant 0 : index
    %c0_22 = arith.constant 0 : index
    %c0_23 = arith.constant 0 : index
    %23 = vector.load %arg9[%c0_21, %c0_22, %c0_23] : memref<2x8x4xf32, #tpu.memory_space<vmem>>, vector<2x8x4xf32>
    tpu.vector_store %arg9[%c0_21, %c0_22, %c0_23], %22 {strides = array<i32>} : memref<2x8x4xf32, #tpu.memory_space<vmem>>, vector<2x8x4xf32>,
    return
  }
  func.func @transform_0(%arg0: i32) -> (i32, i32, i32) {
    %c0_i32 = arith.constant 0 : i32
    %c0_i32_0 = arith.constant 0 : i32
    %c0_i32_1 = arith.constant 0 : i32
    return %arg0, %c0_i32, %c0_i32_0 : i32, i32, i32
  }
  func.func @transform_1(%arg0: i32) -> (i32, i32) {
    %c0_i32 = arith.constant 0 : i32
    %c0_i32_0 = arith.constant 0 : i32
    %c0_i32_1 = arith.constant 0 : i32
    return %c0_i32, %c0_i32_0 : i32, i32
  }
  func.func @transform_2(%arg0: i32) -> (i32, i32) {
    %c0_i32 = arith.constant 0 : i32
    %c0_i32_0 = arith.constant 0 : i32
    %c0_i32_1 = arith.constant 0 : i32
    return %c0_i32, %c0_i32_0 : i32, i32
  }
  func.func @transform_3(%arg0: i32) -> (i32, i32) {
    %c0_i32 = arith.constant 0 : i32
    %c0_i32_0 = arith.constant 0 : i32
    %c0_i32_1 = arith.constant 0 : i32
    return %c0_i32, %c0_i32_0 : i32, i32
  }
  func.func @transform_4(%arg0: i32) -> (i32, i32) {
    %c0_i32 = arith.constant 0 : i32
    %c0_i32_0 = arith.constant 0 : i32
    %c0_i32_1 = arith.constant 0 : i32
    return %c0_i32, %c0_i32_0 : i32, i32
  }
  func.func @transform_5(%arg0: i32) -> (i32, i32) {
    %c0_i32 = arith.constant 0 : i32
    %c0_i32_0 = arith.constant 0 : i32
    %c0_i32_1 = arith.constant 0 : i32
    return %c0_i32, %c0_i32_0 : i32, i32
  }
  func.func @transform_6(%arg0: i32) -> (i32, i32, i32) {
    %c0_i32 = arith.constant 0 : i32
    %c0_i32_0 = arith.constant 0 : i32
    %c0_i32_1 = arith.constant 0 : i32
    %c0_i32_2 = arith.constant 0 : i32
    return %c0_i32, %c0_i32_0, %c0_i32_1 : i32, i32, i32
  }
  func.func @transform_7(%arg0: i32) -> (i32, i32, i32) {
    %c0_i32 = arith.constant 0 : i32
    %c0_i32_0 = arith.constant 0 : i32
    %c0_i32_1 = arith.constant 0 : i32
    return %arg0, %c0_i32, %c0_i32_0 : i32, i32, i32
  }
  func.func @transform_8(%arg0: i32) -> (i32, i32, i32) {
    %c0_i32 = arith.constant 0 : i32
    %c0_i32_0 = arith.constant 0 : i32
    %c0_i32_1 = arith.constant 0 : i32
    return %arg0, %c0_i32, %c0_i32_0 : i32, i32, i32
  }
}

</mosaic_0001>

<llo_original>
// kernel: mlp_encoder_forward.1
$region0: #{mlp_encoder_forward.1}
  #allocation0 [shape = 'u32[]', space=smem, size = 0x4, offset = 0x4, fixed_abs, tag = 'smem constant byte address 0x4 - core index']
  #allocation1 [shape = 'u32[144,128]{1,0:T(1,128)}', space=vmem, size = 0x12000, scoped, tag = 'internal scratch']
  %s0 = inlined_call_operand.vmem [shape: f32[6,8,4], index: 0, kind: input, shape index: {}]
  %s1 = inlined_call_operand.vmem [shape: f32[4,32], index: 1, kind: input, shape index: {}]
  %s2 = inlined_call_operand.vmem [shape: f32[1,32], index: 2, kind: input, shape index: {}]
  %s3 = inlined_call_operand.vmem [shape: f32[32,4], index: 3, kind: input, shape index: {}]
  %s4 = inlined_call_operand.vmem [shape: f32[1,4], index: 4, kind: input, shape index: {}]
  %s5 = inlined_call_operand.vmem [shape: f32[8,8], index: 5, kind: input, shape index: {}]
  %s6 = inlined_call_operand.vmem [shape: f32[1,1,4], index: 6, kind: input, shape index: {}]
  %s7 = inlined_call_operand.vmem [shape: f32[6,8,4], index: 7, kind: output, shape index: {0}]
  %s8 = inlined_call_operand.vmem [shape: f32[6,8,4], index: 8, kind: output, shape index: {1}]
  %9 = xla_tuple %s7, %s8
  %s10 = sld [smem:[#allocation0]]
  $region69: #{mlp_encoder_forward.1} parent=0
    _
  %s12 = ssub.s32 1, %s10
  %s13 = scalar_select 0, %s12, %s10
  loop: start=0, step=1, limit=5
  $region2: #{mlp_encoder_forward.1} parent=0 // loop_pre_header
    _
  $region3: #{mlp_encoder_forward.1} parent=0 // loop_header
    %s15 = sphi 0, %s19
    %p16 = scmp.ge.s32.totalorder %s15, 5
    %s25 = sphi 0, %s27
    %s28 = sphi 0, %s25
    %s29 = sphi 0, %s28
    %s45 = sphi 0, %s29
    %s49 = sphi 0, %s49
    %s51 = sphi 0, %s49
    %s52 = sphi 0, %s51
    %s66 = sphi 0, %s52
    %s70 = sphi 0, %s70
    %s72 = sphi 0, %s70
    %s73 = sphi 0, %s72
    %s87 = sphi 0, %s73
    %s91 = sphi 0, %s91
    %s93 = sphi 0, %s91
    %s94 = sphi 0, %s93
    %s108 = sphi 0, %s94
    %s112 = sphi 0, %s112
    %s114 = sphi 0, %s112
    %s115 = sphi 0, %s114
    %s129 = sphi 0, %s115
    %s133 = sphi 0, %s133
    %s135 = sphi 0, %s133
    %s136 = sphi 0, %s135
    %s150 = sphi 0, %s136
    %s154 = sphi 0, %s154
    %s156 = sphi 0, %s154
    %s157 = sphi 0, %s156
    %s171 = sphi 0, %s157
    %s177 = sphi 0, %s179
    %s180 = sphi 0, %s177
    %s181 = sphi 0, %s180
    %s197 = sphi 0, %s181
    %s203 = sphi 0, %s205
    %s206 = sphi 0, %s203
    %s207 = sphi 0, %s206
    %s223 = sphi 0, %s207
  $region4: #{mlp_encoder_forward.1} parent=0 // loop_header_branch
    %18 = sbr.rel (%p16) target = $region8
  $region5: #{mlp_encoder_forward.1} parent=0 // loop_body
    %s20 = ssub.s32 %s15, 1
    %s21 = ssub.s32 %s15, 2
    %s22 = sadd.s32 %s15, 1
    %s23 = ssub.s32 %s15, %s22
    %p24 = scmp.eq.s32.totalorder %s23, 0
    %s26 = sadd.s32 %s25, 1
    %s27 = scalar_select %p24, %s25, %s26
    %p30 = pneg %p24
    %p31 = scmp.eq.s32.totalorder %s15, 2
    %p32 = por %p30, %p31
    %p33 = scmp.ne.s32.totalorder %s25, %s28
    %p34 = scmp.eq.s32.totalorder %s15, 0
    %p35 = por %p33, %p34
    %p36 = scmp.ne.s32.totalorder %s25, %s28
    %p37 = scmp.eq.s32.totalorder %s20, 2
    %p38 = por %p36, %p37
    %p39 = scmp.ne.s32.totalorder %s28, %s29
    %p40 = scmp.eq.s32.totalorder %s20, 0
    %p41 = por %p39, %p40
    %p42 = scmp.ne.s32.totalorder %s28, %s29
    %p43 = scmp.eq.s32.totalorder %s21, 2
    %p44 = por %p42, %p43
    %p46 = scmp.ne.s32.totalorder %s29, %s45
    %p47 = scmp.eq.s32.totalorder %s21, 0
    %p48 = por %p46, %p47
    %s50 = sadd.s32 %s49, 1
    %p53 = scmp.eq.s32.totalorder %s15, 2
    %p54 = scmp.ne.s32.totalorder %s49, %s51
    %p55 = scmp.eq.s32.totalorder %s15, 0
    %p56 = por %p54, %p55
    %p57 = scmp.ne.s32.totalorder %s49, %s51
    %p58 = scmp.eq.s32.totalorder %s20, 2
    %p59 = por %p57, %p58
    %p60 = scmp.ne.s32.totalorder %s51, %s52
    %p61 = scmp.eq.s32.totalorder %s20, 0
    %p62 = por %p60, %p61
    %p63 = scmp.ne.s32.totalorder %s51, %s52
    %p64 = scmp.eq.s32.totalorder %s21, 2
    %p65 = por %p63, %p64
    %p67 = scmp.ne.s32.totalorder %s52, %s66
    %p68 = scmp.eq.s32.totalorder %s21, 0
    %p69 = por %p67, %p68
    %s71 = sadd.s32 %s70, 1
    %p74 = scmp.eq.s32.totalorder %s15, 2
    %p75 = scmp.ne.s32.totalorder %s70, %s72
    %p76 = scmp.eq.s32.totalorder %s15, 0
    %p77 = por %p75, %p76
    %p78 = scmp.ne.s32.totalorder %s70, %s72
    %p79 = scmp.eq.s32.totalorder %s20, 2
    %p80 = por %p78, %p79
    %p81 = scmp.ne.s32.totalorder %s72, %s73
    %p82 = scmp.eq.s32.totalorder %s20, 0
    %p83 = por %p81, %p82
    %p84 = scmp.ne.s32.totalorder %s72, %s73
    %p85 = scmp.eq.s32.totalorder %s21, 2
    %p86 = por %p84, %p85
    %p88 = scmp.ne.s32.totalorder %s73, %s87
    %p89 = scmp.eq.s32.totalorder %s21, 0
    %p90 = por %p88, %p89
    %s92 = sadd.s32 %s91, 1
    %p95 = scmp.eq.s32.totalorder %s15, 2
    %p96 = scmp.ne.s32.totalorder %s91, %s93
    %p97 = scmp.eq.s32.totalorder %s15, 0
    %p98 = por %p96, %p97
    %p99 = scmp.ne.s32.totalorder %s91, %s93
    %p100 = scmp.eq.s32.totalorder %s20, 2
    %p101 = por %p99, %p100
    %p102 = scmp.ne.s32.totalorder %s93, %s94
    %p103 = scmp.eq.s32.totalorder %s20, 0
    %p104 = por %p102, %p103
    %p105 = scmp.ne.s32.totalorder %s93, %s94
    %p106 = scmp.eq.s32.totalorder %s21, 2
    %p107 = por %p105, %p106
    %p109 = scmp.ne.s32.totalorder %s94, %s108
    %p110 = scmp.eq.s32.totalorder %s21, 0
    %p111 = por %p109, %p110
    %s113 = sadd.s32 %s112, 1
    %p116 = scmp.eq.s32.totalorder %s15, 2
    %p117 = scmp.ne.s32.totalorder %s112, %s114
    %p118 = scmp.eq.s32.totalorder %s15, 0
    %p119 = por %p117, %p118
    %p120 = scmp.ne.s32.totalorder %s112, %s114
    %p121 = scmp.eq.s32.totalorder %s20, 2
    %p122 = por %p120, %p121
    %p123 = scmp.ne.s32.totalorder %s114, %s115
    %p124 = scmp.eq.s32.totalorder %s20, 0
    %p125 = por %p123, %p124
    %p126 = scmp.ne.s32.totalorder %s114, %s115
    %p127 = scmp.eq.s32.totalorder %s21, 2
    %p128 = por %p126, %p127
    %p130 = scmp.ne.s32.totalorder %s115, %s129
    %p131 = scmp.eq.s32.totalorder %s21, 0
    %p132 = por %p130, %p131
    %s134 = sadd.s32 %s133, 1
    %p137 = scmp.eq.s32.totalorder %s15, 2
    %p138 = scmp.ne.s32.totalorder %s133, %s135
    %p139 = scmp.eq.s32.totalorder %s15, 0
    %p140 = por %p138, %p139
    %p141 = scmp.ne.s32.totalorder %s133, %s135
    %p142 = scmp.eq.s32.totalorder %s20, 2
    %p143 = por %p141, %p142
    %p144 = scmp.ne.s32.totalorder %s135, %s136
    %p145 = scmp.eq.s32.totalorder %s20, 0
    %p146 = por %p144, %p145
    %p147 = scmp.ne.s32.totalorder %s135, %s136
    %p148 = scmp.eq.s32.totalorder %s21, 2
    %p149 = por %p147, %p148
    %p151 = scmp.ne.s32.totalorder %s136, %s150
    %p152 = scmp.eq.s32.totalorder %s21, 0
    %p153 = por %p151, %p152
    %s155 = sadd.s32 %s154, 1
    %p158 = scmp.eq.s32.totalorder %s15, 2
    %p159 = scmp.ne.s32.totalorder %s154, %s156
    %p160 = scmp.eq.s32.totalorder %s15, 0
    %p161 = por %p159, %p160
    %p162 = scmp.ne.s32.totalorder %s154, %s156
    %p163 = scmp.eq.s32.totalorder %s20, 2
    %p164 = por %p162, %p163
    %p165 = scmp.ne.s32.totalorder %s156, %s157
    %p166 = scmp.eq.s32.totalorder %s20, 0
    %p167 = por %p165, %p166
    %p168 = scmp.ne.s32.totalorder %s156, %s157
    %p169 = scmp.eq.s32.totalorder %s21, 2
    %p170 = por %p168, %p169
    %p172 = scmp.ne.s32.totalorder %s157, %s171
    %p173 = scmp.eq.s32.totalorder %s21, 0
    %p174 = por %p172, %p173
    %s175 = ssub.s32 %s15, %s22
    %p176 = scmp.eq.s32.totalorder %s175, 0
    %s178 = sadd.s32 %s177, 1
    %s179 = scalar_select %p176, %s177, %s178
    %p182 = pneg %p176
    %p183 = scmp.eq.s32.totalorder %s15, 2
    %p184 = por %p182, %p183
    %p185 = scmp.ne.s32.totalorder %s177, %s180
    %p186 = scmp.eq.s32.totalorder %s15, 0
    %p187 = por %p185, %p186
    %p188 = scmp.ne.s32.totalorder %s177, %s180
    %p189 = scmp.eq.s32.totalorder %s20, 2
    %p190 = por %p188, %p189
    %p191 = scmp.ne.s32.totalorder %s180, %s181
    %p192 = scmp.eq.s32.totalorder %s20, 0
    %p193 = por %p191, %p192
    %p194 = scmp.ne.s32.totalorder %s180, %s181
    %p195 = scmp.eq.s32.totalorder %s21, 2
    %p196 = por %p194, %p195
    %p198 = scmp.ne.s32.totalorder %s181, %s197
    %p199 = scmp.eq.s32.totalorder %s21, 0
    %p200 = por %p198, %p199
    %s201 = ssub.s32 %s15, %s22
    %p202 = scmp.eq.s32.totalorder %s201, 0
    %s204 = sadd.s32 %s203, 1
    %s205 = scalar_select %p202, %s203, %s204
    %p208 = pneg %p202
    %p209 = scmp.eq.s32.totalorder %s15, 2
    %p210 = por %p208, %p209
    %p211 = scmp.ne.s32.totalorder %s203, %s206
    %p212 = scmp.eq.s32.totalorder %s15, 0
    %p213 = por %p211, %p212
    %p214 = scmp.ne.s32.totalorder %s203, %s206
    %p215 = scmp.eq.s32.totalorder %s20, 2
    %p216 = por %p214, %p215
    %p217 = scmp.ne.s32.totalorder %s206, %s207
    %p218 = scmp.eq.s32.totalorder %s20, 0
    %p219 = por %p217, %p218
    %p220 = scmp.ne.s32.totalorder %s206, %s207
    %p221 = scmp.eq.s32.totalorder %s21, 2
    %p222 = por %p220, %p221
    %p224 = scmp.ne.s32.totalorder %s207, %s223
    %p225 = scmp.eq.s32.totalorder %s21, 0
    %p226 = por %p224, %p225
    %p227 = scmp.le.s32.totalorder 1, %s15
    %p228 = scmp.lt.s32.totalorder %s15, 4
    %p229 = pnand %p227, %p228
    %p230 = pneg %p229
    // Predicated region
    $region9: #{mlp_encoder_forward.1} parent=5 // pred_check
      _
    $region10: #{mlp_encoder_forward.1} parent=5 // pred_check_branch
      %232 = sbr.rel (%p229) target = $region12
    $region11: #{mlp_encoder_forward.1} parent=5 // pred_region
      %s233 = ssub.s32 %s15, 1
      // Predicated region
      $region13: #{mlp_encoder_forward.1} parent=11 // pred_check
        %p234 = pneg %p62
      $region14: #{mlp_encoder_forward.1} parent=11 // pred_check_branch
        %236 = sbr.rel (%p234) target = $region16
      $region15: #{mlp_encoder_forward.1} parent=11 // pred_region
        _
      $region16: #{mlp_encoder_forward.1} parent=11 // pred_fallthru
        _
      // Predicated region
      $region17: #{mlp_encoder_forward.1} parent=11 // pred_check
        %p237 = pneg %p83
      $region18: #{mlp_encoder_forward.1} parent=11 // pred_check_branch
        %239 = sbr.rel (%p237) target = $region20
      $region19: #{mlp_encoder_forward.1} parent=11 // pred_region
        _
      $region20: #{mlp_encoder_forward.1} parent=11 // pred_fallthru
        _
      // Predicated region
      $region21: #{mlp_encoder_forward.1} parent=11 // pred_check
        %p240 = pneg %p104
      $region22: #{mlp_encoder_forward.1} parent=11 // pred_check_branch
        %242 = sbr.rel (%p240) target = $region24
      $region23: #{mlp_encoder_forward.1} parent=11 // pred_region
        _
      $region24: #{mlp_encoder_forward.1} parent=11 // pred_fallthru
        _
      // Predicated region
      $region25: #{mlp_encoder_forward.1} parent=11 // pred_check
        %p243 = pneg %p125
      $region26: #{mlp_encoder_forward.1} parent=11 // pred_check_branch
        %245 = sbr.rel (%p243) target = $region28
      $region27: #{mlp_encoder_forward.1} parent=11 // pred_region
        _
      $region28: #{mlp_encoder_forward.1} parent=11 // pred_fallthru
        _
      // Predicated region
      $region29: #{mlp_encoder_forward.1} parent=11 // pred_check
        %p246 = pneg %p146
      $region30: #{mlp_encoder_forward.1} parent=11 // pred_check_branch
        %248 = sbr.rel (%p246) target = $region32
      $region31: #{mlp_encoder_forward.1} parent=11 // pred_region
        _
      $region32: #{mlp_encoder_forward.1} parent=11 // pred_fallthru
        _
      // Predicated region
      $region33: #{mlp_encoder_forward.1} parent=11 // pred_check
        %p249 = pneg %p167
      $region34: #{mlp_encoder_forward.1} parent=11 // pred_check_branch
        %251 = sbr.rel (%p249) target = $region36
      $region35: #{mlp_encoder_forward.1} parent=11 // pred_region
        _
      $region36: #{mlp_encoder_forward.1} parent=11 // pred_fallthru
        _
    $region12: #{mlp_encoder_forward.1} parent=5 // pred_fallthru
      _
    %p252 = scmp.lt.s32.totalorder %s15, 3
    // Predicated region
    $region37: #{mlp_encoder_forward.1} parent=5 // pred_check
      %p253 = pneg %p252
    $region38: #{mlp_encoder_forward.1} parent=5 // pred_check_branch
      %255 = sbr.rel (%p253) target = $region40
    $region39: #{mlp_encoder_forward.1} parent=5 // pred_region
      // Predicated region
      $region41: #{mlp_encoder_forward.1} parent=39 // pred_check
        %p256 = pneg %p35
      $region42: #{mlp_encoder_forward.1} parent=39 // pred_check_branch
        %258 = sbr.rel (%p256) target = $region44
      $region43: #{mlp_encoder_forward.1} parent=39 // pred_region
        %s259 = smul.u32 2, %s15
        %p260 = scmp.lt.s32.totalorder %s259, 5
        %s261 = scalar_select %p260, %s259, 5
        %s262 = smul.addr %s261, 8
        %s263 = scalar_lea.vmem %s0, %s262
        %s264 = smul.u32 2, %s15
      $region44: #{mlp_encoder_forward.1} parent=39 // pred_fallthru
        _
    $region40: #{mlp_encoder_forward.1} parent=5 // pred_fallthru
      _
    %p265 = scmp.le.s32.totalorder 1, %s15
    %p266 = scmp.lt.s32.totalorder %s15, 4
    %p267 = pnand %p265, %p266
    %p268 = pneg %p267
    // Predicated region
    $region45: #{mlp_encoder_forward.1} parent=5 // pred_check
      _
    $region46: #{mlp_encoder_forward.1} parent=5 // pred_check_branch
      %270 = sbr.rel (%p267) target = $region48
    $region47: #{mlp_encoder_forward.1} parent=5 // pred_region
      %s271 = ssub.s32 %s15, 1
      %s272 = smul.u32 2, %s20
      %p273 = scmp.lt.s32.totalorder %s272, 5
      %s274 = scalar_select %p273, %s272, 5
      %s275 = smul.addr %s274, 8
      %s276 = scalar_lea.vmem %s0, %s275
      %p277 = pneg %p41
      %p278 = pneg %p38
      %p279 = pneg %p62
      %p280 = pneg %p59
      %p281 = pneg %p83
      %p282 = pneg %p80
      %p283 = pneg %p104
      %p284 = pneg %p101
      %p285 = pneg %p125
      %p286 = pneg %p122
      %p287 = pneg %p146
      %p288 = pneg %p143
      %p289 = pneg %p167
      %p290 = pneg %p164
      %p291 = pneg %p193
      %p292 = pneg %p190
      %s293 = smul.u32 2, %s20
      %p294 = scmp.lt.s32.totalorder %s293, 5
      %s295 = scalar_select %p294, %s293, 5
      %s296 = smul.addr %s295, 8
      %s297 = scalar_lea.vmem %s7, %s296
      %p298 = pneg %p219
      %p299 = pneg %p216
      %s300 = smul.u32 2, %s20
      %p301 = scmp.lt.s32.totalorder %s300, 5
      %s302 = scalar_select %p301, %s300, 5
      %s303 = smul.addr %s302, 8
      %s304 = scalar_lea.vmem %s8, %s303
      %s305 = smul.u32 2, %s20
      %p306 = scmp.lt.s32.totalorder %s305, 5
      %s307 = scalar_select %p306, %s305, 5
      %s308 = smul.addr %s307, 8
      %s309 = scalar_lea.vmem %s0, %s308
      %s310 = smul.u32 2, %s20
      %s311 = smul.u32 2, %s20
      %p312 = scmp.lt.s32.totalorder %s311, 5
      %s313 = scalar_select %p312, %s311, 5
      %s314 = smul.addr %s313, 8
      %s315 = scalar_lea.vmem %s7, %s314
      %s316 = smul.u32 2, %s20
      %s317 = smul.u32 2, %s20
      %p318 = scmp.lt.s32.totalorder %s317, 5
      %s319 = scalar_select %p318, %s317, 5
      %s320 = smul.addr %s319, 8
      %s321 = scalar_lea.vmem %s8, %s320
      %s322 = smul.u32 2, %s20
      %v323 = vld [vmem:[%s309] sm:$0xff]
      %v324 = vld [vmem:[%s309 + $0x8] sm:$0xff]
      %v325 = vld [vmem:[%s1] sm:$0xf]
      %v326 = vld [vmem:[%s2] sm:$0x1]
      %v328 = vlaneseq
      %v329 = vshrl.u32 %v328, 7
      %v330 = vsub.s32 0, %v329
      %v331 = vrot.slane %v326, %v330
      %vm333 = vcmask 31744
      %v335 = vsel %vm333, %v323, 0
      %v338 = vsel %vm333, %v324, 0
      %vm340 = vcmask 1043456
      %v342 = vsel %vm340, %v325, 0
      %344 = vmatprep.subr.mxu0 0.0
      %345 = vmatpush1.msra.mxu0 0.0
      %346 = vmatprep.subr.mxu0 0.0
      %347 = vmatpush1.msra.mxu0 0.0
      %348 = vmatprep.subr.mxu0 0.0
      %349 = vmatpush1.msra.mxu0 0.0
      %350 = vmatprep.subr.mxu0 0.0
      %351 = vmatpush1.msra.mxu0 0.0
      %352 = vmatprep.subr.mxu0 0.0
      %353 = vmatpush1.msra.mxu0 0.0
      %354 = vmatprep.subr.mxu0 0.0
      %355 = vmatpush1.msra.mxu0 0.0
      %356 = vmatprep.subr.mxu0 0.0
      %357 = vmatpush1.msra.mxu0 0.0
      %358 = vmatprep.subr.mxu0 0.0
      %359 = vmatpush1.msra.mxu0 0.0
      %360 = vmatprep.subr.mxu0 0.0
      %361 = vmatpush1.msra.mxu0 0.0
      %362 = vmatprep.subr.mxu0 0.0
      %363 = vmatpush1.msra.mxu0 0.0
      %364 = vmatprep.subr.mxu0 0.0
      %365 = vmatpush1.msra.mxu0 0.0
      %366 = vmatprep.subr.mxu0 0.0
      %367 = vmatpush1.msra.mxu0 0.0
      %368 = vmatprep.subr.mxu0 0.0
      %369 = vmatpush1.msra.mxu0 0.0
      %370 = vmatprep.subr.mxu0 0.0
      %371 = vmatpush1.msra.mxu0 0.0
      %372 = vmatprep.subr.mxu0 0.0
      %373 = vmatpush1.msra.mxu0 0.0
      %374 = vmatprep.subr.mxu0 0.0
      %375 = vmatpush1.msra.mxu0 %v342
      %376 = vmatprep.subr.mxu0 0.0
      %377 = vmatpush2.msra.mxu0 0.0
      %378 = vmatprep.subr.mxu0 0.0
      %379 = vmatpush2.msra.mxu0 0.0
      %380 = vmatprep.subr.mxu0 0.0
      %381 = vmatpush2.msra.mxu0 0.0
      %382 = vmatprep.subr.mxu0 0.0
      %383 = vmatpush2.msra.mxu0 0.0
      %384 = vmatprep.subr.mxu0 0.0
      %385 = vmatpush2.msra.mxu0 0.0
      %386 = vmatprep.subr.mxu0 0.0
      %387 = vmatpush2.msra.mxu0 0.0
      %388 = vmatprep.subr.mxu0 0.0
      %389 = vmatpush2.msra.mxu0 0.0
      %390 = vmatprep.subr.mxu0 0.0
      %391 = vmatpush2.msra.mxu0 0.0
      %392 = vmatprep.subr.mxu0 0.0
      %393 = vmatpush2.msra.mxu0 0.0
      %394 = vmatprep.subr.mxu0 0.0
      %395 = vmatpush2.msra.mxu0 0.0
      %396 = vmatprep.subr.mxu0 0.0
      %397 = vmatpush2.msra.mxu0 0.0
      %398 = vmatprep.subr.mxu0 0.0
      %399 = vmatpush2.msra.mxu0 0.0
      %400 = vmatprep.subr.mxu0 0.0
      %401 = vmatpush2.msra.mxu0 0.0
      %402 = vmatprep.subr.mxu0 0.0
      %403 = vmatpush2.msra.mxu0 0.0
      %404 = vmatprep.subr.mxu0 0.0
      %405 = vmatpush2.msra.mxu0 0.0
      %406 = vmatprep.subr.mxu0 0.0
      %407 = vmatpush2.msra.mxu0 0.0
      %408 = vmatprep.mubr.f32.mxu0 0.0
      %409 = vmatmul.mubr.f32.gmra.mxu0 %v335
      %v410 = vpop.f32.mrf.mxu0
      %v411 = vadd.f32 %v331, %v410
      %v412 = vpop.f32.mrf.mxu0
      %413 = vmatprep.mubr.f32.mxu0 0.0
      %414 = vmatmul.mubr.f32.gmra.mxu0 %v338
      %v415 = vpop.f32.mrf.mxu0
      %v416 = vadd.f32 %v331, %v415
      %v417 = vpop.f32.mrf.mxu0
      %418 = vdwg.mxu0
      %v419 = vmax.f32 %v411, 0.0
      %v420 = vmax.f32 %v416, 0.0
      %v421 = vld [vmem:[%s3] sm:$0xff]
      %v422 = vld [vmem:[%s3 + $0x8] sm:$0xff]
      %v423 = vld [vmem:[%s3 + $0x10] sm:$0xff]
      %v424 = vld [vmem:[%s3 + $0x18] sm:$0xff]
      %v425 = vld [vmem:[%s4] sm:$0x1]
      %v427 = vlaneseq
      %v428 = vshrl.u32 %v427, 7
      %v429 = vsub.s32 0, %v428
      %v430 = vrot.slane %v425, %v429
      %vm432 = vcmask 261120
      %v434 = vsel %vm432, %v419, 0
      %v437 = vsel %vm432, %v420, 0
      %439 = vmatprep.subr.mxu0 0.0
      %440 = vmatpush1.msra.mxu0 0.0
      %441 = vmatprep.subr.mxu0 0.0
      %442 = vmatpush1.msra.mxu0 0.0
      %443 = vmatprep.subr.mxu0 0.0
      %444 = vmatpush1.msra.mxu0 0.0
      %445 = vmatprep.subr.mxu0 0.0
      %446 = vmatpush1.msra.mxu0 0.0
      %447 = vmatprep.subr.mxu0 0.0
      %448 = vmatpush1.msra.mxu0 0.0
      %449 = vmatprep.subr.mxu0 0.0
      %450 = vmatpush1.msra.mxu0 0.0
      %451 = vmatprep.subr.mxu0 0.0
      %452 = vmatpush1.msra.mxu0 0.0
      %453 = vmatprep.subr.mxu0 0.0
      %454 = vmatpush1.msra.mxu0 0.0
      %455 = vmatprep.subr.mxu0 0.0
      %456 = vmatpush1.msra.mxu0 0.0
      %457 = vmatprep.subr.mxu0 0.0
      %458 = vmatpush1.msra.mxu0 0.0
      %459 = vmatprep.subr.mxu0 0.0
      %460 = vmatpush1.msra.mxu0 0.0
      %461 = vmatprep.subr.mxu0 0.0
      %462 = vmatpush1.msra.mxu0 0.0
      %463 = vmatprep.subr.mxu0 0.0
      %464 = vmatpush1.msra.mxu0 %v424
      %465 = vmatprep.subr.mxu0 0.0
      %466 = vmatpush1.msra.mxu0 %v423
      %467 = vmatprep.subr.mxu0 0.0
      %468 = vmatpush1.msra.mxu0 %v422
      %469 = vmatprep.subr.mxu0 0.0
      %470 = vmatpush1.msra.mxu0 %v421
      %471 = vmatprep.subr.mxu0 0.0
      %472 = vmatpush2.msra.mxu0 0.0
      %473 = vmatprep.subr.mxu0 0.0
      %474 = vmatpush2.msra.mxu0 0.0
      %475 = vmatprep.subr.mxu0 0.0
      %476 = vmatpush2.msra.mxu0 0.0
      %477 = vmatprep.subr.mxu0 0.0
      %478 = vmatpush2.msra.mxu0 0.0
      %479 = vmatprep.subr.mxu0 0.0
      %480 = vmatpush2.msra.mxu0 0.0
      %481 = vmatprep.subr.mxu0 0.0
      %482 = vmatpush2.msra.mxu0 0.0
      %483 = vmatprep.subr.mxu0 0.0
      %484 = vmatpush2.msra.mxu0 0.0
      %485 = vmatprep.subr.mxu0 0.0
      %486 = vmatpush2.msra.mxu0 0.0
      %487 = vmatprep.subr.mxu0 0.0
      %488 = vmatpush2.msra.mxu0 0.0
      %489 = vmatprep.subr.mxu0 0.0
      %490 = vmatpush2.msra.mxu0 0.0
      %491 = vmatprep.subr.mxu0 0.0
      %492 = vmatpush2.msra.mxu0 0.0
      %493 = vmatprep.subr.mxu0 0.0
      %494 = vmatpush2.msra.mxu0 0.0
      %495 = vmatprep.subr.mxu0 0.0
      %496 = vmatpush2.msra.mxu0 0.0
      %497 = vmatprep.subr.mxu0 0.0
      %498 = vmatpush2.msra.mxu0 0.0
      %499 = vmatprep.subr.mxu0 0.0
      %500 = vmatpush2.msra.mxu0 0.0
      %501 = vmatprep.subr.mxu0 0.0
      %502 = vmatpush2.msra.mxu0 0.0
      %503 = vmatprep.mubr.f32.mxu0 0.0
      %504 = vmatmul.mubr.f32.gmra.mxu0 %v434
      %v505 = vpop.f32.mrf.mxu0
      %v506 = vadd.f32 %v430, %v505
      %v507 = vpop.f32.mrf.mxu0
      %508 = vmatprep.mubr.f32.mxu0 0.0
      %509 = vmatmul.mubr.f32.gmra.mxu0 %v437
      %v510 = vpop.f32.mrf.mxu0
      %v511 = vadd.f32 %v430, %v510
      %v512 = vpop.f32.mrf.mxu0
      %513 = vdwg.mxu0
      %514 = vst.msk [vmem:[%s315] sm:$0xff] %vm333, %v506
      %515 = vst.msk [vmem:[%s315 + $0x8] sm:$0xff] %vm333, %v511
      %v516 = vld [vmem:[%s6] sm:$0x1]
      %v518 = vlaneseq
      %v519 = vshrl.u32 %v518, 7
      %v520 = vsub.s32 0, %v519
      %v521 = vrot.slane %v516, %v520
      %v523 = vadd.f32 %v506, %v521
      %v524 = vadd.f32 %v511, %v521
      %v525 = vld [vmem:[%s5] sm:$0xff]
      %526 = vxpose.xlu0.b32.start [1/16] %v523, 128
      %527 = vxpose.xlu0.b32.cont [2/16] 0.0, 128
      %528 = vxpose.xlu0.b32.cont [3/16] 0.0, 128
      %529 = vxpose.xlu0.b32.cont [4/16] 0.0, 128
      %530 = vxpose.xlu0.b32.cont [5/16] 0.0, 128
      %531 = vxpose.xlu0.b32.cont [6/16] 0.0, 128
      %532 = vxpose.xlu0.b32.cont [7/16] 0.0, 128
      %533 = vxpose.xlu0.b32.cont [8/16] 0.0, 128
      %534 = vxpose.xlu0.b32.cont [9/16] 0.0, 128
      %535 = vxpose.xlu0.b32.cont [10/16] 0.0, 128
      %536 = vxpose.xlu0.b32.cont [11/16] 0.0, 128
      %537 = vxpose.xlu0.b32.cont [12/16] 0.0, 128
      %538 = vxpose.xlu0.b32.cont [13/16] 0.0, 128
      %539 = vxpose.xlu0.b32.cont [14/16] 0.0, 128
      %540 = vxpose.xlu0.b32.cont [15/16] 0.0, 128
      %541 = vxpose.xlu0.b32.end [16/16] 0.0, 128
      %v542 = vpop.trf.xlu0
      %v543 = vpop.trf.xlu0
      %v544 = vpop.trf.xlu0
      %v545 = vpop.trf.xlu0
      %v546 = vpop.trf.xlu0
      %v547 = vpop.trf.xlu0
      %v548 = vpop.trf.xlu0
      %v549 = vpop.trf.xlu0
      %v550 = vpop.trf.xlu0
      %v551 = vpop.trf.xlu0
      %v552 = vpop.trf.xlu0
      %v553 = vpop.trf.xlu0
      %v554 = vpop.trf.xlu0
      %v555 = vpop.trf.xlu0
      %v556 = vpop.trf.xlu0
      %v557 = vpop.trf.xlu0
      %558 = vxpose.xlu0.b32.start [1/16] %v524, 128
      %559 = vxpose.xlu0.b32.cont [2/16] 0.0, 128
      %560 = vxpose.xlu0.b32.cont [3/16] 0.0, 128
      %561 = vxpose.xlu0.b32.cont [4/16] 0.0, 128
      %562 = vxpose.xlu0.b32.cont [5/16] 0.0, 128
      %563 = vxpose.xlu0.b32.cont [6/16] 0.0, 128
      %564 = vxpose.xlu0.b32.cont [7/16] 0.0, 128
      %565 = vxpose.xlu0.b32.cont [8/16] 0.0, 128
      %566 = vxpose.xlu0.b32.cont [9/16] 0.0, 128
      %567 = vxpose.xlu0.b32.cont [10/16] 0.0, 128
      %568 = vxpose.xlu0.b32.cont [11/16] 0.0, 128
      %569 = vxpose.xlu0.b32.cont [12/16] 0.0, 128
      %570 = vxpose.xlu0.b32.cont [13/16] 0.0, 128
      %571 = vxpose.xlu0.b32.cont [14/16] 0.0, 128
      %572 = vxpose.xlu0.b32.cont [15/16] 0.0, 128
      %573 = vxpose.xlu0.b32.end [16/16] 0.0, 128
      %v574 = vpop.trf.xlu0
      %v575 = vpop.trf.xlu0
      %v576 = vpop.trf.xlu0
      %v577 = vpop.trf.xlu0
      %v578 = vpop.trf.xlu0
      %v579 = vpop.trf.xlu0
      %v580 = vpop.trf.xlu0
      %v581 = vpop.trf.xlu0
      %v582 = vpop.trf.xlu0
      %v583 = vpop.trf.xlu0
      %v584 = vpop.trf.xlu0
      %v585 = vpop.trf.xlu0
      %v586 = vpop.trf.xlu0
      %v587 = vpop.trf.xlu0
      %v588 = vpop.trf.xlu0
      %v589 = vpop.trf.xlu0
      %v592 = vcombine.low %v542, %v574
      %vm593 = vcmask 64512
      %v594 = vsel %vm593, %v592, 0
      %v597 = vsel %vm593, %v525, 0
      %599 = vmatprep.subr.mxu0 0.0
      %600 = vmatpush1.xpose.msra.mxu0 0.0
      %601 = vmatprep.subr.mxu0 0.0
      %602 = vmatpush1.xpose.msra.mxu0 0.0
      %603 = vmatprep.subr.mxu0 0.0
      %604 = vmatpush1.xpose.msra.mxu0 0.0
      %605 = vmatprep.subr.mxu0 0.0
      %606 = vmatpush1.xpose.msra.mxu0 0.0
      %607 = vmatprep.subr.mxu0 0.0
      %608 = vmatpush1.xpose.msra.mxu0 0.0
      %609 = vmatprep.subr.mxu0 0.0
      %610 = vmatpush1.xpose.msra.mxu0 0.0
      %611 = vmatprep.subr.mxu0 0.0
      %612 = vmatpush1.xpose.msra.mxu0 0.0
      %613 = vmatprep.subr.mxu0 0.0
      %614 = vmatpush1.xpose.msra.mxu0 0.0
      %615 = vmatprep.subr.mxu0 0.0
      %616 = vmatpush1.xpose.msra.mxu0 0.0
      %617 = vmatprep.subr.mxu0 0.0
      %618 = vmatpush1.xpose.msra.mxu0 0.0
      %619 = vmatprep.subr.mxu0 0.0
      %620 = vmatpush1.xpose.msra.mxu0 0.0
      %621 = vmatprep.subr.mxu0 0.0
      %622 = vmatpush1.xpose.msra.mxu0 0.0
      %623 = vmatprep.subr.mxu0 0.0
      %624 = vmatpush1.xpose.msra.mxu0 0.0
      %625 = vmatprep.subr.mxu0 0.0
      %626 = vmatpush1.xpose.msra.mxu0 0.0
      %627 = vmatprep.subr.mxu0 0.0
      %628 = vmatpush1.xpose.msra.mxu0 0.0
      %629 = vmatprep.subr.mxu0 0.0
      %630 = vmatpush1.xpose.msra.mxu0 %v597
      %631 = vmatprep.subr.mxu0 0.0
      %632 = vmatpush2.xpose.msra.mxu0 0.0
      %633 = vmatprep.subr.mxu0 0.0
      %634 = vmatpush2.xpose.msra.mxu0 0.0
      %635 = vmatprep.subr.mxu0 0.0
      %636 = vmatpush2.xpose.msra.mxu0 0.0
      %637 = vmatprep.subr.mxu0 0.0
      %638 = vmatpush2.xpose.msra.mxu0 0.0
      %639 = vmatprep.subr.mxu0 0.0
      %640 = vmatpush2.xpose.msra.mxu0 0.0
      %641 = vmatprep.subr.mxu0 0.0
      %642 = vmatpush2.xpose.msra.mxu0 0.0
      %643 = vmatprep.subr.mxu0 0.0
      %644 = vmatpush2.xpose.msra.mxu0 0.0
      %645 = vmatprep.subr.mxu0 0.0
      %646 = vmatpush2.xpose.msra.mxu0 0.0
      %647 = vmatprep.subr.mxu0 0.0
      %648 = vmatpush2.xpose.msra.mxu0 0.0
      %649 = vmatprep.subr.mxu0 0.0
      %650 = vmatpush2.xpose.msra.mxu0 0.0
      %651 = vmatprep.subr.mxu0 0.0
      %652 = vmatpush2.xpose.msra.mxu0 0.0
      %653 = vmatprep.subr.mxu0 0.0
      %654 = vmatpush2.xpose.msra.mxu0 0.0
      %655 = vmatprep.subr.mxu0 0.0
      %656 = vmatpush2.xpose.msra.mxu0 0.0
      %657 = vmatprep.subr.mxu0 0.0
      %658 = vmatpush2.xpose.msra.mxu0 0.0
      %659 = vmatprep.subr.mxu0 0.0
      %660 = vmatpush2.xpose.msra.mxu0 0.0
      %661 = vmatprep.subr.mxu0 0.0
      %662 = vmatpush2.xpose.msra.mxu0 0.0
      %663 = vmatprep.mubr.f32.mxu0 0.0
      %664 = vmatmul.mubr.f32.gmra.mxu0 %v594
      %v665 = vpop.f32.mrf.mxu0
      %v666 = vadd.f32 0.0, %v665
      %v667 = vpop.f32.mrf.mxu0
      %668 = vdwg.mxu0
      %v670 = vcombine.high %v666, %v666
      %672 = vxpose.xlu0.b32.start [1/16] %v666, 128
      %673 = vxpose.xlu0.b32.cont [2/16] 0.0, 128
      %674 = vxpose.xlu0.b32.cont [3/16] 0.0, 128
      %675 = vxpose.xlu0.b32.cont [4/16] 0.0, 128
      %676 = vxpose.xlu0.b32.cont [5/16] 0.0, 128
      %677 = vxpose.xlu0.b32.cont [6/16] 0.0, 128
      %678 = vxpose.xlu0.b32.cont [7/16] 0.0, 128
      %679 = vxpose.xlu0.b32.cont [8/16] 0.0, 128
      %680 = vxpose.xlu0.b32.cont [9/16] 0.0, 128
      %681 = vxpose.xlu0.b32.cont [10/16] 0.0, 128
      %682 = vxpose.xlu0.b32.cont [11/16] 0.0, 128
      %683 = vxpose.xlu0.b32.cont [12/16] 0.0, 128
      %684 = vxpose.xlu0.b32.cont [13/16] 0.0, 128
      %685 = vxpose.xlu0.b32.cont [14/16] 0.0, 128
      %686 = vxpose.xlu0.b32.cont [15/16] 0.0, 128
      %687 = vxpose.xlu0.b32.end [16/16] 0.0, 128
      %v688 = vpop.trf.xlu0
      %v689 = vpop.trf.xlu0
      %v690 = vpop.trf.xlu0
      %v691 = vpop.trf.xlu0
      %v692 = vpop.trf.xlu0
      %v693 = vpop.trf.xlu0
      %v694 = vpop.trf.xlu0
      %v695 = vpop.trf.xlu0
      %v696 = vpop.trf.xlu0
      %v697 = vpop.trf.xlu0
      %v698 = vpop.trf.xlu0
      %v699 = vpop.trf.xlu0
      %v700 = vpop.trf.xlu0
      %v701 = vpop.trf.xlu0
      %v702 = vpop.trf.xlu0
      %v703 = vpop.trf.xlu0
      %704 = vxpose.xlu0.b32.start [1/16] %v670, 128
      %705 = vxpose.xlu0.b32.cont [2/16] 0.0, 128
      %706 = vxpose.xlu0.b32.cont [3/16] 0.0, 128
      %707 = vxpose.xlu0.b32.cont [4/16] 0.0, 128
      %708 = vxpose.xlu0.b32.cont [5/16] 0.0, 128
      %709 = vxpose.xlu0.b32.cont [6/16] 0.0, 128
      %710 = vxpose.xlu0.b32.cont [7/16] 0.0, 128
      %711 = vxpose.xlu0.b32.cont [8/16] 0.0, 128
      %712 = vxpose.xlu0.b32.cont [9/16] 0.0, 128
      %713 = vxpose.xlu0.b32.cont [10/16] 0.0, 128
      %714 = vxpose.xlu0.b32.cont [11/16] 0.0, 128
      %715 = vxpose.xlu0.b32.cont [12/16] 0.0, 128
      %716 = vxpose.xlu0.b32.cont [13/16] 0.0, 128
      %717 = vxpose.xlu0.b32.cont [14/16] 0.0, 128
      %718 = vxpose.xlu0.b32.cont [15/16] 0.0, 128
      %719 = vxpose.xlu0.b32.end [16/16] 0.0, 128
      %v720 = vpop.trf.xlu0
      %v721 = vpop.trf.xlu0
      %v722 = vpop.trf.xlu0
      %v723 = vpop.trf.xlu0
      %v724 = vpop.trf.xlu0
      %v725 = vpop.trf.xlu0
      %v726 = vpop.trf.xlu0
      %v727 = vpop.trf.xlu0
      %v728 = vpop.trf.xlu0
      %v729 = vpop.trf.xlu0
      %v730 = vpop.trf.xlu0
      %v731 = vpop.trf.xlu0
      %v732 = vpop.trf.xlu0
      %v733 = vpop.trf.xlu0
      %v734 = vpop.trf.xlu0
      %v735 = vpop.trf.xlu0
      %v736 = vsub.f32 %v506, %v688
      %v737 = vsub.f32 %v511, %v720
      %738 = vst.msk [vmem:[%s321] sm:$0xff] %vm333, %v736
      %739 = vst.msk [vmem:[%s321 + $0x8] sm:$0xff] %vm333, %v737
      %s740 = smul.u32 2, %s20
      %p741 = scmp.lt.s32.totalorder %s740, 5
      %s742 = scalar_select %p741, %s740, 5
      %s743 = smul.addr %s742, 8
      %s744 = scalar_lea.vmem %s7, %s743
      %s745 = smul.u32 2, %s20
      %p746 = scmp.lt.s32.totalorder %s745, 5
      %s747 = scalar_select %p746, %s745, 5
      %s748 = smul.addr %s747, 8
      %s749 = scalar_lea.vmem %s8, %s748
      // Predicated region
      $region49: #{mlp_encoder_forward.1} parent=47 // pred_check
        %p750 = pneg %p190
      $region50: #{mlp_encoder_forward.1} parent=47 // pred_check_branch
        %752 = sbr.rel (%p750) target = $region52
      $region51: #{mlp_encoder_forward.1} parent=47 // pred_region
        %s753 = smul.u32 2, %s20
      $region52: #{mlp_encoder_forward.1} parent=47 // pred_fallthru
        _
      // Predicated region
      $region53: #{mlp_encoder_forward.1} parent=47 // pred_check
        %p754 = pneg %p216
      $region54: #{mlp_encoder_forward.1} parent=47 // pred_check_branch
        %756 = sbr.rel (%p754) target = $region56
      $region55: #{mlp_encoder_forward.1} parent=47 // pred_region
        %s757 = smul.u32 2, %s20
      $region56: #{mlp_encoder_forward.1} parent=47 // pred_fallthru
        _
    $region48: #{mlp_encoder_forward.1} parent=5 // pred_fallthru
      _
    %p758 = scmp.le.s32.totalorder 2, %s15
    // Predicated region
    $region57: #{mlp_encoder_forward.1} parent=5 // pred_check
      %p759 = pneg %p758
    $region58: #{mlp_encoder_forward.1} parent=5 // pred_check_branch
      %761 = sbr.rel (%p759) target = $region60
    $region59: #{mlp_encoder_forward.1} parent=5 // pred_region
      %s762 = ssub.s32 %s15, 2
      // Predicated region
      $region61: #{mlp_encoder_forward.1} parent=59 // pred_check
        %p763 = pneg %p196
      $region62: #{mlp_encoder_forward.1} parent=59 // pred_check_branch
        %765 = sbr.rel (%p763) target = $region64
      $region63: #{mlp_encoder_forward.1} parent=59 // pred_region
        %s766 = smul.u32 2, %s21
        %p767 = scmp.lt.s32.totalorder %s766, 5
        %s768 = scalar_select %p767, %s766, 5
        %s769 = smul.addr %s768, 8
        %s770 = scalar_lea.vmem %s7, %s769
      $region64: #{mlp_encoder_forward.1} parent=59 // pred_fallthru
        _
      // Predicated region
      $region65: #{mlp_encoder_forward.1} parent=59 // pred_check
        %p771 = pneg %p222
      $region66: #{mlp_encoder_forward.1} parent=59 // pred_check_branch
        %773 = sbr.rel (%p771) target = $region68
      $region67: #{mlp_encoder_forward.1} parent=59 // pred_region
        %s774 = smul.u32 2, %s21
        %p775 = scmp.lt.s32.totalorder %s774, 5
        %s776 = scalar_select %p775, %s774, 5
        %s777 = smul.addr %s776, 8
        %s778 = scalar_lea.vmem %s8, %s777
      $region68: #{mlp_encoder_forward.1} parent=59 // pred_fallthru
        _
    $region60: #{mlp_encoder_forward.1} parent=5 // pred_fallthru
      _
  $region6: #{mlp_encoder_forward.1} parent=0 // loop_footer
    %s19 = sadd.s32 1, %s15
  $region7: #{mlp_encoder_forward.1} parent=0 // loop_footer_branch
    %14 = sbr.rel target = $region3
  $region8: #{mlp_encoder_forward.1} parent=0 // loop_exit
    _

</llo_original>
